<compile_context>
chip_gen: v5e
topology: v5e:2x2
jax: 0.10.0
libtpu: 0.0.40
codegen_flags: <defaults>
</compile_context>

<pallas_src>
import functools

import jax
import jax.numpy as jnp
from jax import lax
from jax.experimental import pallas as pl
from jax.experimental.pallas import tpu as pltpu


def _soft_iou_kernel(pred_ref, lbl_ref, inter_ref, card_ref, *,
                     binary, hw, tile, lanes, need_mask):
    """One (batch n, pixel-tile t) grid step.

    pred_ref : (C_in, tile)   native-dtype logits (C_in == 1 when binary)
    lbl_ref  : (1, tile)      int32 labels
    inter_ref, card_ref : (C_eff, lanes) f32 per-batch accumulators (outputs,
        resident across the "arbitrary" tile axis).
    """
    t = pl.program_id(1)

    @pl.when(t == 0)
    def _():
        inter_ref[...] = jnp.zeros_like(inter_ref)
        card_ref[...] = jnp.zeros_like(card_ref)

    n_chunks = tile // lanes                       # static
    acc_shape = inter_ref.shape                    # (C_eff, lanes)

    inter_acc = jnp.zeros(acc_shape, jnp.float32)
    card_acc = jnp.zeros(acc_shape, jnp.float32)

    # Static unrolled loop over lane chunks: bounds the vreg working set and
    # keeps the reduction as pure VPU adds into a lane-dense accumulator.
    for k in range(n_chunks):
        s = k * lanes
        x = pred_ref[:, s:s + lanes].astype(jnp.float32)   # (C_in, lanes)
        lbl = lbl_ref[:, s:s + lanes]                       # (1, lanes) int32

        if binary:
            # Reference C==1 path: probas = [sigmoid(x), 1 - sigmoid(x)],
            # true_1_hot = [lbl==1, lbl==0]  ==> class index is (1 - lbl).
            p1 = 1.0 / (1.0 + jnp.exp(-x))                  # (1, lanes)
            cls = lax.broadcasted_iota(jnp.int32, (2, lanes), 0)
            probas = jnp.where(cls == 0, p1, 1.0 - p1)      # (2, lanes)
            target = 1 - lbl
        else:
            # softmax over the class (sublane) axis == F.softmax(pred, dim=1)
            m = jnp.max(x, axis=0, keepdims=True)
            e = jnp.exp(x - m)
            denom = jnp.sum(e, axis=0, keepdims=True)
            probas = e * pl.reciprocal(denom, approx=True)  # EUP reciprocal
            cls = lax.broadcasted_iota(jnp.int32, probas.shape, 0)
            target = lbl

        hit = target == cls                                 # fused one-hot

        if need_mask:
            # Ragged last tile: block contents past H*W are unspecified, so
            # mask BOTH probas and the one-hot (jnp.where is NaN-safe).
            pix = t * tile + s + lax.broadcasted_iota(jnp.int32, probas.shape, 1)
            valid = pix < hw
            probas = jnp.where(valid, probas, 0.0)
            hit = jnp.logical_and(hit, valid)

        one_hot = hit.astype(jnp.float32)
        inter_acc = inter_acc + probas * one_hot
        card_acc = card_acc + probas + one_hot

    inter_ref[...] += inter_acc
    card_ref[...] += card_acc


def soft_iou_loss(pred, lbl, *, delta=1e-12, tile_pixels=4096, lane_chunk=512):
    """pred: (N, C, H, W) float logits (any float dtype); lbl: (N, 1, H, W) ints."""
    N, C, H, W = pred.shape
    HW = H * W
    binary = (C == 1)
    c_eff = 2 if binary else C

    # Tile over pixels: multiple of 128, no larger than the 128-rounded pixel
    # count (so small spatial sizes get a single exact tile, no masking).
    hw_pad = ((HW + 127) // 128) * 128
    tile = max(128, min((tile_pixels // 128) * 128, hw_pad))
    # Lane-chunk width (= accumulator lane width) must divide the tile.
    lanes = max(128, lane_chunk)
    while tile % lanes != 0:
        lanes //= 2
    lanes = max(lanes, 128)

    n_tiles = pl.cdiv(HW, tile)
    need_mask = (HW % tile) != 0

    pred2 = pred.reshape(N, C, HW)                 # free reshape, native dtype
    lbl2 = lbl.reshape(N, 1, HW).astype(jnp.int32)

    kernel = functools.partial(
        _soft_iou_kernel, binary=binary, hw=HW, tile=tile, lanes=lanes,
        need_mask=need_mask)

    inter, card = pl.pallas_call(
        kernel,
        out_shape=(
            jax.ShapeDtypeStruct((N, c_eff, lanes), jnp.float32),
            jax.ShapeDtypeStruct((N, c_eff, lanes), jnp.float32),
        ),
        grid_spec=pltpu.PrefetchScalarGridSpec(
            num_scalar_prefetch=0,
            grid=(N, n_tiles),
            in_specs=[
                pl.BlockSpec((None, C, tile), lambda n, t: (n, 0, t)),
                pl.BlockSpec((None, 1, tile), lambda n, t: (n, 0, t)),
            ],
            out_specs=[
                pl.BlockSpec((None, c_eff, lanes), lambda n, t: (n, 0, 0)),
                pl.BlockSpec((None, c_eff, lanes), lambda n, t: (n, 0, 0)),
            ],
        ),
        compiler_params=pltpu.CompilerParams(
            # batch axis can shard across TensorCores (v7x); pixel axis is the
            # reduction carried in the resident output accumulators.
            dimension_semantics=("parallel", "arbitrary"),
        ),
    )(pred2, lbl2)

    # Tiny finalization in plain JAX: sum partials over batch shards + lanes,
    # then dice / mean (reduction dims (0, 2, 3) of the reference).
    inter_c = jnp.sum(inter, axis=(0, 2))          # (c_eff,)
    card_c = jnp.sum(card, axis=(0, 2))            # (c_eff,)
    dice = 2.0 * inter_c / (card_c + delta)
    return 1.0 - jnp.mean(dice)


def _soft_iou_loss_ref(pred, lbl, delta=1e-12):
    """Plain-JAX reference mirroring the PyTorch forward (C > 1 path)."""
    C = pred.shape[1]
    probas = jax.nn.softmax(pred.astype(jnp.float32), axis=1)        # (N,C,H,W)
    true_1_hot = jax.nn.one_hot(lbl[:, 0], C, dtype=jnp.float32)     # (N,H,W,C)
    true_1_hot = jnp.transpose(true_1_hot, (0, 3, 1, 2))             # (N,C,H,W)
    dims = (0, 2, 3)
    intersection = jnp.sum(probas * true_1_hot, axis=dims)
    cardinality = jnp.sum(probas + true_1_hot, axis=dims)
    dice = jnp.mean(2.0 * intersection / (cardinality + delta))
    return 1.0 - dice


def _soft_iou_loss_ref_binary(pred, lbl, delta=1e-12):
    """Plain-JAX reference mirroring the PyTorch forward (C == 1 path)."""
    pos = jax.nn.sigmoid(pred.astype(jnp.float32))                   # (N,1,H,W)
    probas = jnp.concatenate([pos, 1.0 - pos], axis=1)               # (N,2,H,W)
    t1 = (lbl[:, 0] == 1).astype(jnp.float32)
    t0 = (lbl[:, 0] == 0).astype(jnp.float32)
    true_1_hot = jnp.stack([t1, t0], axis=1)                         # (N,2,H,W)
    dims = (0, 2, 3)
    intersection = jnp.sum(probas * true_1_hot, axis=dims)
    cardinality = jnp.sum(probas + true_1_hot, axis=dims)
    dice = jnp.mean(2.0 * intersection / (cardinality + delta))
    return 1.0 - dice


if __name__ == "__main__":
    key = jax.random.PRNGKey(0)
    k1, k2, k3, k4 = jax.random.split(key, 4)

    # Multi-class (softmax) branch.
    N, C, H, W = 2, 4, 16, 16
    pred = jax.random.normal(k1, (N, C, H, W), dtype=jnp.float32)
    lbl = jax.random.randint(k2, (N, 1, H, W), 0, C, dtype=jnp.int32)

    loss = jax.block_until_ready(soft_iou_loss(pred, lbl))
    ref = jax.block_until_ready(_soft_iou_loss_ref(pred, lbl))
    # Tolerance loosened vs. 1e-5 because the softmax denominator uses the
    # approximate EUP reciprocal (per the performance review).
    assert jnp.allclose(loss, ref, atol=1e-3, rtol=1e-3), (loss, ref)

    # Binary (C == 1, sigmoid) branch — specialized inside the kernel.
    pred_b = jax.random.normal(k3, (N, 1, H, W), dtype=jnp.float32)
    lbl_b = jax.random.randint(k4, (N, 1, H, W), 0, 2, dtype=jnp.int32)

    loss_b = jax.block_until_ready(soft_iou_loss(pred_b, lbl_b))
    ref_b = jax.block_until_ready(_soft_iou_loss_ref_binary(pred_b, lbl_b))
    assert jnp.allclose(loss_b, ref_b, atol=1e-3, rtol=1e-3), (loss_b, ref_b)

    print("KERNEL_OK")
</pallas_src>

<mosaic_0001>
module attributes {stable_mosaic.version = 11 : i64} {
  func.func @_soft_iou_kernel(%arg0: i32, %arg1: i32, %arg2: memref<1x4x256xf32, #tpu.memory_space<vmem>>, %arg3: memref<1x1x256xi32, #tpu.memory_space<vmem>>, %arg4: memref<1x4x256xf32, #tpu.memory_space<vmem>>, %arg5: memref<1x4x256xf32, #tpu.memory_space<vmem>>) attributes {dimension_semantics = [#tpu.dimension_semantics<parallel>, #tpu.dimension_semantics<arbitrary>], iteration_bounds = array<i64: 2, 1>, scalar_prefetch = 0 : i64, scratch_operands = 0 : i64, tpu.core_type = #tpu.core_type<tc>, window_params = [{transform_indices = @transform_0, window_bounds = array<i64: 1, 4, 256>}, {transform_indices = @transform_1, window_bounds = array<i64: 1, 1, 256>}, {transform_indices = @transform_2, window_bounds = array<i64: 1, 4, 256>}, {transform_indices = @transform_3, window_bounds = array<i64: 1, 4, 256>}]} {
    %c0_i32 = arith.constant 0 : i32
    %0 = arith.cmpi eq, %arg1, %c0_i32 : i32
    %1 = arith.extui %0 : i1 to i32
    %c0_i32_0 = arith.constant 0 : i32
    %2 = arith.cmpi ne, %1, %c0_i32_0 : i32
    scf.if %2 {
      %cst_21 = arith.constant 0.000000e+00 : f32
      %40 = vector.broadcast %cst_21 : f32 to vector<4x256xf32>
      %c0_22 = arith.constant 0 : index
      %c0_23 = arith.constant 0 : index
      %c0_24 = arith.constant 0 : index
      %41 = vector.load %arg4[%c0_22, %c0_23, %c0_24] : memref<1x4x256xf32, #tpu.memory_space<vmem>>, vector<1x4x256xf32>
      %42 = vector.shape_cast %41 : vector<1x4x256xf32> to vector<4x256xf32>
      %43 = vector.shape_cast %40 : vector<4x256xf32> to vector<1x4x256xf32>
      tpu.vector_store %arg4[%c0_22, %c0_23, %c0_24], %43 {strides = array<i32>} : memref<1x4x256xf32, #tpu.memory_space<vmem>>, vector<1x4x256xf32>,
      %cst_25 = arith.constant 0.000000e+00 : f32
      %44 = vector.broadcast %cst_25 : f32 to vector<4x256xf32>
      %c0_26 = arith.constant 0 : index
      %c0_27 = arith.constant 0 : index
      %c0_28 = arith.constant 0 : index
      %45 = vector.load %arg5[%c0_26, %c0_27, %c0_28] : memref<1x4x256xf32, #tpu.memory_space<vmem>>, vector<1x4x256xf32>
      %46 = vector.shape_cast %45 : vector<1x4x256xf32> to vector<4x256xf32>
      %47 = vector.shape_cast %44 : vector<4x256xf32> to vector<1x4x256xf32>
      tpu.vector_store %arg5[%c0_26, %c0_27, %c0_28], %47 {strides = array<i32>} : memref<1x4x256xf32, #tpu.memory_space<vmem>>, vector<1x4x256xf32>,
    } else {
    }
    %cst = arith.constant 0.000000e+00 : f32
    %3 = vector.broadcast %cst : f32 to vector<4x256xf32>
    %cst_1 = arith.constant 0.000000e+00 : f32
    %4 = vector.broadcast %cst_1 : f32 to vector<4x256xf32>
    %c0 = arith.constant 0 : index
    %c0_2 = arith.constant 0 : index
    %c0_3 = arith.constant 0 : index
    %5 = vector.load %arg2[%c0, %c0_2, %c0_3] : memref<1x4x256xf32, #tpu.memory_space<vmem>>, vector<1x4x256xf32>
    %6 = vector.shape_cast %5 : vector<1x4x256xf32> to vector<4x256xf32>
    %c0_4 = arith.constant 0 : index
    %c0_5 = arith.constant 0 : index
    %c0_6 = arith.constant 0 : index
    %7 = vector.load %arg3[%c0_4, %c0_5, %c0_6] : memref<1x1x256xi32, #tpu.memory_space<vmem>>, vector<1x1x256xi32>
    %8 = vector.shape_cast %7 : vector<1x1x256xi32> to vector<1x256xi32>
    %cst_7 = arith.constant dense<0xFF800000> : vector<256xf32>
    %9 = vector.multi_reduction <maximumf>, %6, %cst_7 [0] : vector<4x256xf32> to vector<256xf32>
    %10 = vector.shape_cast %9 : vector<256xf32> to vector<1x256xf32>
    %11 = vector.broadcast %10 : vector<1x256xf32> to vector<4x256xf32>
    %12 = arith.subf %6, %11 : vector<4x256xf32>
    %13 = math.exp %12 : vector<4x256xf32>
    %cst_8 = arith.constant dense<0.000000e+00> : vector<256xf32>
    %14 = vector.multi_reduction <add>, %13, %cst_8 [0] : vector<4x256xf32> to vector<256xf32>
    %15 = vector.shape_cast %14 : vector<256xf32> to vector<1x256xf32>
    %16 = tpu.reciprocal %15 {approx = true} : vector<1x256xf32> -> vector<1x256xf32>
    %17 = vector.broadcast %16 : vector<1x256xf32> to vector<4x256xf32>
    %18 = arith.mulf %13, %17 : vector<4x256xf32>
    %19 = tpu.iota {dimensions = array<i32: 0>} : vector<4x256xi32>
    %20 = vector.broadcast %8 : vector<1x256xi32> to vector<4x256xi32>
    %21 = arith.cmpi eq, %20, %19 : vector<4x256xi32>
    %22 = arith.extui %21 : vector<4x256xi1> to vector<4x256xi32>
    %23 = arith.sitofp %22 : vector<4x256xi32> to vector<4x256xf32>
    %24 = arith.mulf %18, %23 : vector<4x256xf32>
    %25 = arith.addf %3, %24 : vector<4x256xf32>
    %26 = arith.addf %4, %18 : vector<4x256xf32>
    %27 = arith.addf %26, %23 : vector<4x256xf32>
    %c0_9 = arith.constant 0 : index
    %c0_10 = arith.constant 0 : index
    %c0_11 = arith.constant 0 : index
    %28 = vector.load %arg4[%c0_9, %c0_10, %c0_11] : memref<1x4x256xf32, #tpu.memory_space<vmem>>, vector<1x4x256xf32>
    %29 = vector.shape_cast %28 : vector<1x4x256xf32> to vector<4x256xf32>
    %30 = arith.addf %29, %25 : vector<4x256xf32>
    %c0_12 = arith.constant 0 : index
    %c0_13 = arith.constant 0 : index
    %c0_14 = arith.constant 0 : index
    %31 = vector.load %arg4[%c0_12, %c0_13, %c0_14] : memref<1x4x256xf32, #tpu.memory_space<vmem>>, vector<1x4x256xf32>
    %32 = vector.shape_cast %31 : vector<1x4x256xf32> to vector<4x256xf32>
    %33 = vector.shape_cast %30 : vector<4x256xf32> to vector<1x4x256xf32>
    tpu.vector_store %arg4[%c0_12, %c0_13, %c0_14], %33 {strides = array<i32>} : memref<1x4x256xf32, #tpu.memory_space<vmem>>, vector<1x4x256xf32>,
    %c0_15 = arith.constant 0 : index
    %c0_16 = arith.constant 0 : index
    %c0_17 = arith.constant 0 : index
    %34 = vector.load %arg5[%c0_15, %c0_16, %c0_17] : memref<1x4x256xf32, #tpu.memory_space<vmem>>, vector<1x4x256xf32>
    %35 = vector.shape_cast %34 : vector<1x4x256xf32> to vector<4x256xf32>
    %36 = arith.addf %35, %27 : vector<4x256xf32>
    %c0_18 = arith.constant 0 : index
    %c0_19 = arith.constant 0 : index
    %c0_20 = arith.constant 0 : index
    %37 = vector.load %arg5[%c0_18, %c0_19, %c0_20] : memref<1x4x256xf32, #tpu.memory_space<vmem>>, vector<1x4x256xf32>
    %38 = vector.shape_cast %37 : vector<1x4x256xf32> to vector<4x256xf32>
    %39 = vector.shape_cast %36 : vector<4x256xf32> to vector<1x4x256xf32>
    tpu.vector_store %arg5[%c0_18, %c0_19, %c0_20], %39 {strides = array<i32>} : memref<1x4x256xf32, #tpu.memory_space<vmem>>, vector<1x4x256xf32>,
    return
  }
  func.func @transform_0(%arg0: i32, %arg1: i32) -> (i32, i32, i32) {
    %c0_i32 = arith.constant 0 : i32
    %c0_i32_0 = arith.constant 0 : i32
    return %arg0, %c0_i32, %arg1 : i32, i32, i32
  }
  func.func @transform_1(%arg0: i32, %arg1: i32) -> (i32, i32, i32) {
    %c0_i32 = arith.constant 0 : i32
    %c0_i32_0 = arith.constant 0 : i32
    return %arg0, %c0_i32, %arg1 : i32, i32, i32
  }
  func.func @transform_2(%arg0: i32, %arg1: i32) -> (i32, i32, i32) {
    %c0_i32 = arith.constant 0 : i32
    %c0_i32_0 = arith.constant 0 : i32
    %c0_i32_1 = arith.constant 0 : i32
    return %arg0, %c0_i32, %c0_i32_0 : i32, i32, i32
  }
  func.func @transform_3(%arg0: i32, %arg1: i32) -> (i32, i32, i32) {
    %c0_i32 = arith.constant 0 : i32
    %c0_i32_0 = arith.constant 0 : i32
    %c0_i32_1 = arith.constant 0 : i32
    return %arg0, %c0_i32, %c0_i32_0 : i32, i32, i32
  }
}

</mosaic_0001>

<llo_original>
// kernel: tpu_custom_call.1
$region0: #{tpu_custom_call.1}
  #allocation0 [shape = 'u32[]', space=smem, size = 0x4, offset = 0x4, fixed_abs, tag = 'smem constant byte address 0x4 - core index']
  #allocation1 [shape = 'u32[72,128]{1,0:T(1,128)}', space=vmem, size = 0x9000, scoped, tag = 'internal scratch']
  %s0 = inlined_call_operand.hbm [shape: f32[2,4,256], index: 0, kind: input, shape index: {}]
  %s1 = inlined_call_operand.hbm [shape: s32[2,1,256], index: 1, kind: input, shape index: {}]
  %s2 = inlined_call_operand.hbm [shape: f32[2,4,256], index: 2, kind: output, shape index: {0}]
  %s3 = inlined_call_operand.hbm [shape: f32[2,4,256], index: 3, kind: output, shape index: {1}]
  %4 = xla_tuple %s2, %s3
  %s5 = sld [smem:[#allocation0]]
  $region61: #{tpu_custom_call.1} parent=0
    _
  %s7 = ssub.s32 1, %s5
  %s8 = scalar_select 0, %s7, %s5
  $region1: #{tpu_custom_call.1} parent=0
    #allocation2 [shape = 'u8[8192]{0}', space=vmem, size = 0x2000, scoped, tag = 'input window, operand 0']
    #allocation3 [shape = 's32[2]{0}', space=sflag, size = 0x8, scoped, tag = 'scoped memory for tpu_custom_call.1']
    #allocation4 [shape = 's32[2]{0}', space=sflag, size = 0x8, scoped, tag = 'scoped memory for tpu_custom_call.1']
    #allocation5 [shape = 'u8[2048]{0}', space=vmem, size = 0x800, scoped, tag = 'input window, operand 1']
    #allocation6 [shape = 's32[2]{0}', space=sflag, size = 0x8, scoped, tag = 'scoped memory for tpu_custom_call.1']
    #allocation7 [shape = 'u8[8192]{0}', space=vmem, size = 0x2000, scoped, tag = 'output window, operand 0']
    #allocation8 [shape = 'u8[8192]{0}', space=vmem, size = 0x2000, scoped, tag = 'output window, operand 1']
    #allocation9 [shape = 's32[2]{0}', space=sflag, size = 0x8, scoped, tag = 'scoped memory for tpu_custom_call.1']
    %9 = vsyncpa [#allocation3], 0
    %s10 = scalar_lea.sflag [#allocation3], 1
    %11 = vsyncpa %s10, 0
    %12 = vsyncpa [#allocation6], 0
    %s13 = scalar_lea.sflag [#allocation6], 1
    %14 = vsyncpa %s13, 0
    %15 = vsyncpa [#allocation4], 0
    %s16 = scalar_lea.sflag [#allocation4], 1
    %17 = vsyncpa %s16, 0
    %18 = vsyncpa [#allocation9], 0
    %s19 = scalar_lea.sflag [#allocation9], 1
    %20 = vsyncpa %s19, 0
    loop: start=0, step=1, limit=4
    $region2: #{tpu_custom_call.1} parent=1 // loop_pre_header
      _
    $region3: #{tpu_custom_call.1} parent=1 // loop_header
      %s22 = sphi 0, %s26
      %p23 = scmp.ge.s32.totalorder %s22, 4
      %s29 = sphi 0, %s41
      %s30 = sphi 0, %s37
      %s31 = sphi 0, %s29
      %s32 = sphi 0, %s30
      %s33 = sphi 0, %s31
      %s34 = sphi 0, %s32
      %s46 = sphi 0, %s48
      %s49 = sphi 0, %s46
      %s50 = sphi 0, %s49
      %s66 = sphi 0, %s50
      %s74 = sphi 0, %s76
      %s77 = sphi 0, %s74
      %s78 = sphi 0, %s77
      %s94 = sphi 0, %s78
      %s100 = sphi 0, %s102
      %s103 = sphi 0, %s100
      %s104 = sphi 0, %s103
      %s120 = sphi 0, %s104
      %s126 = sphi 0, %s128
      %s129 = sphi 0, %s126
      %s130 = sphi 0, %s129
      %s146 = sphi 0, %s130
    $region4: #{tpu_custom_call.1} parent=1 // loop_header_branch
      %25 = sbr.rel (%p23) target = $region8
    $region5: #{tpu_custom_call.1} parent=1 // loop_body
      %s27 = ssub.s32 %s22, 1
      %s28 = ssub.s32 %s22, 2
      %s35 = sadd.s32 1, %s30
      %p36 = scmp.ge.s32.totalorder %s35, 1
      %s37 = scalar_select %p36, 0, %s35
      %s38 = sadd.s32 1, %s29
      %s39 = scalar_select %p36, %s38, %s29
      %p40 = scmp.ge.s32.totalorder %s39, 2
      %s41 = scalar_select %p40, 0, %s39
      %s42 = ssub.s32 %s29, %s41
      %s43 = ssub.s32 %s30, %s37
      %s44 = sor.u32 %s42, %s43
      %p45 = scmp.eq.s32.totalorder %s44, 0
      %s47 = sadd.s32 %s46, 1
      %s48 = scalar_select %p45, %s46, %s47
      %p51 = pneg %p45
      %p52 = scmp.eq.s32.totalorder %s22, 1
      %p53 = por %p51, %p52
      %p54 = scmp.ne.s32.totalorder %s46, %s49
      %p55 = scmp.eq.s32.totalorder %s22, 0
      %p56 = por %p54, %p55
      %p57 = scmp.ne.s32.totalorder %s46, %s49
      %p58 = scmp.eq.s32.totalorder %s27, 1
      %p59 = por %p57, %p58
      %p60 = scmp.ne.s32.totalorder %s49, %s50
      %p61 = scmp.eq.s32.totalorder %s27, 0
      %p62 = por %p60, %p61
      %p63 = scmp.ne.s32.totalorder %s49, %s50
      %p64 = scmp.eq.s32.totalorder %s28, 1
      %p65 = por %p63, %p64
      %p67 = scmp.ne.s32.totalorder %s50, %s66
      %p68 = scmp.eq.s32.totalorder %s28, 0
      %p69 = por %p67, %p68
      %s70 = ssub.s32 %s29, %s41
      %s71 = ssub.s32 %s30, %s37
      %s72 = sor.u32 %s70, %s71
      %p73 = scmp.eq.s32.totalorder %s72, 0
      %s75 = sadd.s32 %s74, 1
      %s76 = scalar_select %p73, %s74, %s75
      %p79 = pneg %p73
      %p80 = scmp.eq.s32.totalorder %s22, 1
      %p81 = por %p79, %p80
      %p82 = scmp.ne.s32.totalorder %s74, %s77
      %p83 = scmp.eq.s32.totalorder %s22, 0
      %p84 = por %p82, %p83
      %p85 = scmp.ne.s32.totalorder %s74, %s77
      %p86 = scmp.eq.s32.totalorder %s27, 1
      %p87 = por %p85, %p86
      %p88 = scmp.ne.s32.totalorder %s77, %s78
      %p89 = scmp.eq.s32.totalorder %s27, 0
      %p90 = por %p88, %p89
      %p91 = scmp.ne.s32.totalorder %s77, %s78
      %p92 = scmp.eq.s32.totalorder %s28, 1
      %p93 = por %p91, %p92
      %p95 = scmp.ne.s32.totalorder %s78, %s94
      %p96 = scmp.eq.s32.totalorder %s28, 0
      %p97 = por %p95, %p96
      %s98 = ssub.s32 %s29, %s41
      %p99 = scmp.eq.s32.totalorder %s98, 0
      %s101 = sadd.s32 %s100, 1
      %s102 = scalar_select %p99, %s100, %s101
      %p105 = pneg %p99
      %p106 = scmp.eq.s32.totalorder %s22, 1
      %p107 = por %p105, %p106
      %p108 = scmp.ne.s32.totalorder %s100, %s103
      %p109 = scmp.eq.s32.totalorder %s22, 0
      %p110 = por %p108, %p109
      %p111 = scmp.ne.s32.totalorder %s100, %s103
      %p112 = scmp.eq.s32.totalorder %s27, 1
      %p113 = por %p111, %p112
      %p114 = scmp.ne.s32.totalorder %s103, %s104
      %p115 = scmp.eq.s32.totalorder %s27, 0
      %p116 = por %p114, %p115
      %p117 = scmp.ne.s32.totalorder %s103, %s104
      %p118 = scmp.eq.s32.totalorder %s28, 1
      %p119 = por %p117, %p118
      %p121 = scmp.ne.s32.totalorder %s104, %s120
      %p122 = scmp.eq.s32.totalorder %s28, 0
      %p123 = por %p121, %p122
      %s124 = ssub.s32 %s29, %s41
      %p125 = scmp.eq.s32.totalorder %s124, 0
      %s127 = sadd.s32 %s126, 1
      %s128 = scalar_select %p125, %s126, %s127
      %p131 = pneg %p125
      %p132 = scmp.eq.s32.totalorder %s22, 1
      %p133 = por %p131, %p132
      %p134 = scmp.ne.s32.totalorder %s126, %s129
      %p135 = scmp.eq.s32.totalorder %s22, 0
      %p136 = por %p134, %p135
      %p137 = scmp.ne.s32.totalorder %s126, %s129
      %p138 = scmp.eq.s32.totalorder %s27, 1
      %p139 = por %p137, %p138
      %p140 = scmp.ne.s32.totalorder %s129, %s130
      %p141 = scmp.eq.s32.totalorder %s27, 0
      %p142 = por %p140, %p141
      %p143 = scmp.ne.s32.totalorder %s129, %s130
      %p144 = scmp.eq.s32.totalorder %s28, 1
      %p145 = por %p143, %p144
      %p147 = scmp.ne.s32.totalorder %s130, %s146
      %p148 = scmp.eq.s32.totalorder %s28, 0
      %p149 = por %p147, %p148
      %p150 = scmp.le.s32.totalorder 1, %s22
      %p151 = scmp.lt.s32.totalorder %s22, 3
      %p152 = pnand %p150, %p151
      %p153 = pneg %p152
      // Predicated region
      $region9: #{tpu_custom_call.1} parent=5 // pred_check
        _
      $region10: #{tpu_custom_call.1} parent=5 // pred_check_branch
        %155 = sbr.rel (%p152) target = $region12
      $region11: #{tpu_custom_call.1} parent=5 // pred_region
        %s156 = ssub.s32 %s22, 1
      $region12: #{tpu_custom_call.1} parent=5 // pred_fallthru
        _
      %p157 = scmp.lt.s32.totalorder %s22, 2
      // Predicated region
      $region13: #{tpu_custom_call.1} parent=5 // pred_check
        %p158 = pneg %p157
      $region14: #{tpu_custom_call.1} parent=5 // pred_check_branch
        %160 = sbr.rel (%p158) target = $region16
      $region15: #{tpu_custom_call.1} parent=5 // pred_region
        // Predicated region
        $region17: #{tpu_custom_call.1} parent=15 // pred_check
          %p161 = pneg %p56
        $region18: #{tpu_custom_call.1} parent=15 // pred_check_branch
          %163 = sbr.rel (%p161) target = $region20
        $region19: #{tpu_custom_call.1} parent=15 // pred_region
          %s164 = sand.u32 %s46, 1
          %s165 = scalar_lea.sflag [#allocation3], %s164
          %s166 = sand.u32 %s46, 1
          %s167 = smul.addr %s166, 8
          %s168 = scalar_lea.vmem [#allocation2], %s167
          %s169 = smul.u32 2, %s30
          %171 = vsyncadd %s165, 0
          %s172 = smul.addr %s29, 2
          %s173 = sadd.s32 %s169, %s172
          %s174 = smul.addr %s173, 4
          %s175 = scalar_lea.hbm %s0, %s174
          %s177 = sshll.u32 %s175, 4
          %s178 = int_to_ptr.hbm [resolvable:$true] %s177
          %s179 = sshll.u32 %s168, 4
          %s180 = int_to_ptr.vmem [resolvable:$true] %s179
          %182 = dma.hbm_to_vmem [thread:$0]  %s178, 128, %s180, %s165
        $region20: #{tpu_custom_call.1} parent=15 // pred_fallthru
          _
        // Predicated region
        $region21: #{tpu_custom_call.1} parent=15 // pred_check
          %p183 = pneg %p84
        $region22: #{tpu_custom_call.1} parent=15 // pred_check_branch
          %185 = sbr.rel (%p183) target = $region24
        $region23: #{tpu_custom_call.1} parent=15 // pred_region
          %s186 = sand.u32 %s74, 1
          %s187 = scalar_lea.sflag [#allocation6], %s186
          %s188 = sand.u32 %s74, 1
          %s189 = smul.addr %s188, 2
          %s190 = scalar_lea.vmem [#allocation5], %s189
          %s191 = smul.u32 2, %s30
          %193 = vsyncadd %s187, 0
          %s194 = smul.addr %s29, 2
          %s195 = sadd.s32 %s191, %s194
          %s196 = scalar_lea.hbm %s1, %s195
          %s198 = sshll.u32 %s196, 4
          %s199 = int_to_ptr.hbm [resolvable:$true] %s198
          %s200 = sshll.u32 %s190, 4
          %s201 = int_to_ptr.vmem [resolvable:$true] %s200
          %203 = dma.hbm_to_vmem [thread:$0]  %s199, 32, %s201, %s187
        $region24: #{tpu_custom_call.1} parent=15 // pred_fallthru
          _
      $region16: #{tpu_custom_call.1} parent=5 // pred_fallthru
        _
      %p204 = scmp.le.s32.totalorder 1, %s22
      %p205 = scmp.lt.s32.totalorder %s22, 3
      %p206 = pnand %p204, %p205
      %p207 = pneg %p206
      // Predicated region
      $region25: #{tpu_custom_call.1} parent=5 // pred_check
        _
      $region26: #{tpu_custom_call.1} parent=5 // pred_check_branch
        %209 = sbr.rel (%p206) target = $region28
      $region27: #{tpu_custom_call.1} parent=5 // pred_region
        %s210 = ssub.s32 %s22, 1
        %s211 = sand.u32 %s49, 1
        %s212 = scalar_lea.sflag [#allocation3], %s211
        %s213 = sand.u32 %s49, 1
        %s214 = smul.addr %s213, 8
        %s215 = scalar_lea.vmem [#allocation2], %s214
        // Predicated region
        $region29: #{tpu_custom_call.1} parent=27 // pred_check
          %p216 = pneg %p62
        $region30: #{tpu_custom_call.1} parent=27 // pred_check_branch
          %218 = sbr.rel (%p216) target = $region32
        $region31: #{tpu_custom_call.1} parent=27 // pred_region
          %220 = dma.done %s212, 128
        $region32: #{tpu_custom_call.1} parent=27 // pred_fallthru
          _
        %s221 = sand.u32 %s77, 1
        %s222 = scalar_lea.sflag [#allocation6], %s221
        %s223 = sand.u32 %s77, 1
        %s224 = smul.addr %s223, 2
        %s225 = scalar_lea.vmem [#allocation5], %s224
        // Predicated region
        $region33: #{tpu_custom_call.1} parent=27 // pred_check
          %p226 = pneg %p90
        $region34: #{tpu_custom_call.1} parent=27 // pred_check_branch
          %228 = sbr.rel (%p226) target = $region36
        $region35: #{tpu_custom_call.1} parent=27 // pred_region
          %230 = dma.done %s222, 32
        $region36: #{tpu_custom_call.1} parent=27 // pred_fallthru
          _
        %s231 = sand.u32 %s49, 1
        %s232 = scalar_lea.sflag [#allocation3], %s231
        %s233 = sand.u32 %s49, 1
        %s234 = smul.addr %s233, 8
        %s235 = scalar_lea.vmem [#allocation2], %s234
        %p236 = pneg %p62
        %p237 = pneg %p59
        %s238 = sand.u32 %s77, 1
        %s239 = scalar_lea.sflag [#allocation6], %s238
        %s240 = sand.u32 %s77, 1
        %s241 = smul.addr %s240, 2
        %s242 = scalar_lea.vmem [#allocation5], %s241
        %p243 = pneg %p90
        %p244 = pneg %p87
        %p245 = pneg %p116
        %p246 = pneg %p113
        %s247 = sand.u32 %s103, 1
        %s248 = scalar_lea.sflag [#allocation4], %s247
        %s249 = sand.u32 %s103, 1
        %s250 = smul.addr %s249, 8
        %s251 = scalar_lea.vmem [#allocation7], %s250
        %p252 = pneg %p142
        %p253 = pneg %p139
        %s254 = sand.u32 %s129, 1
        %s255 = scalar_lea.sflag [#allocation9], %s254
        %s256 = sand.u32 %s129, 1
        %s257 = smul.addr %s256, 8
        %s258 = scalar_lea.vmem [#allocation8], %s257
        %s259 = smul.u32 2, %s32
        %s260 = smul.u32 2, %s32
        %p261 = scmp.eq.s32.totalorder %s32, 0
        // Predicated region
        $region37: #{tpu_custom_call.1} parent=27 // pred_check
          %p262 = pneg %p261
        $region38: #{tpu_custom_call.1} parent=27 // pred_check_branch
          %264 = sbr.rel (%p262) target = $region40
        $region39: #{tpu_custom_call.1} parent=27 // pred_region
          %265 = vst [vmem:[%s251] sm:$0xff] 0.0
          %266 = vst [vmem:[%s258] sm:$0xff] 0.0
        $region40: #{tpu_custom_call.1} parent=27 // pred_fallthru
          _
        %v267 = vld [vmem:[%s215] sm:$0xff]
        %v268 = vld [vmem:[%s225] sm:$0x3]
        %270 = vst [vmem:[#allocation1] ss:$2 sm:$0xff] %v267
        %v271 = vld.sshfl [vmem:[#allocation1] sm:$0xff pattern:$0x75316420]
        %v272 = vld.sshfl [vmem:[#allocation1 + $0x8] sm:$0xff pattern:$0x75316420]
        %vm275 = vcmask 1043456
        %v276 = vsel %vm275, %v271, -inf
        %v277 = vrot.slane %v276, 4
        %v278 = vmax.f32 %v276, %v277
        %v279 = vrot.slane %v278, 2
        %v280 = vmax.f32 %v278, %v279
        %v281 = vrot.slane %v280, 1
        %v282 = vmax.f32 %v280, %v281
        %v283 = vsel %vm275, %v272, -inf
        %v284 = vrot.slane %v283, 4
        %v285 = vmax.f32 %v283, %v284
        %v286 = vrot.slane %v285, 2
        %v287 = vmax.f32 %v285, %v286
        %v288 = vrot.slane %v287, 1
        %v289 = vmax.f32 %v287, %v288
        %v292 = vrot.slane %v289, 4
        %v293 = vsel %vm275, %v282, %v292
        %v295 = vsub.f32 %v267, %v293
        %v296 = vmul.f32 %v295, 1.442695
        %v297 = vpow.pop %v296
        %299 = vst [vmem:[#allocation1] ss:$2 sm:$0xff] %v297
        %v300 = vld.sshfl [vmem:[#allocation1] sm:$0xff pattern:$0x75316420]
        %v301 = vld.sshfl [vmem:[#allocation1 + $0x8] sm:$0xff pattern:$0x75316420]
        %v304 = vsel %vm275, %v300, 0.0
        %v305 = vrot.slane %v304, 4
        %v306 = vadd.f32 %v304, %v305
        %v307 = vrot.slane %v306, 2
        %v308 = vadd.f32 %v306, %v307
        %v309 = vrot.slane %v308, 1
        %v310 = vadd.f32 %v308, %v309
        %v311 = vsel %vm275, %v301, 0.0
        %v312 = vrot.slane %v311, 4
        %v313 = vadd.f32 %v311, %v312
        %v314 = vrot.slane %v313, 2
        %v315 = vadd.f32 %v313, %v314
        %v316 = vrot.slane %v315, 1
        %v317 = vadd.f32 %v315, %v316
        %v318 = vrcp.pop %v310
        %v319 = vrcp.pop %v317
        %v322 = vrot.slane %v319, 4
        %v323 = vsel %vm275, %v318, %v322
        %v325 = vmul.f32 %v297, %v323
        %v326 = vlaneseq
        %v327 = vshrl.u32 %v326, 7
        %v328 = vperm.slane %v268, 0
        %v329 = vperm.slane %v268, 1
        %vm330 = vcmp.eq.s32.totalorder %v328, %v327
        %vm331 = vcmp.eq.s32.totalorder %v329, %v327
        %v332 = vsel %vm330, 1, 0
        %v333 = vsel %vm331, 1, 0
        %v334 = vcvt.s32.f32 %v332
        %v335 = vcvt.s32.f32 %v333
        %v338 = vrot.slane %v335, 4
        %v339 = vsel %vm275, %v334, %v338
        %v341 = vmul.f32 %v325, %v339
        %v342 = vadd.f32 %v341, 0.0
        %v343 = vadd.f32 %v325, 0.0
        %v344 = vadd.f32 %v343, %v339
        %v345 = vld [vmem:[%s251] sm:$0xff]
        %v346 = vadd.f32 %v345, %v342
        %347 = vst [vmem:[%s251] sm:$0xff] %v346
        %v348 = vld [vmem:[%s258] sm:$0xff]
        %v349 = vadd.f32 %v348, %v344
        %350 = vst [vmem:[%s258] sm:$0xff] %v349
        %s351 = sand.u32 %s103, 1
        %s352 = scalar_lea.sflag [#allocation4], %s351
        %s353 = sand.u32 %s103, 1
        %s354 = smul.addr %s353, 8
        %s355 = scalar_lea.vmem [#allocation7], %s354
        %s356 = sand.u32 %s129, 1
        %s357 = scalar_lea.sflag [#allocation9], %s356
        %s358 = sand.u32 %s129, 1
        %s359 = smul.addr %s358, 8
        %s360 = scalar_lea.vmem [#allocation8], %s359
        // Predicated region
        $region41: #{tpu_custom_call.1} parent=27 // pred_check
          %p361 = pneg %p113
        $region42: #{tpu_custom_call.1} parent=27 // pred_check_branch
          %363 = sbr.rel (%p361) target = $region44
        $region43: #{tpu_custom_call.1} parent=27 // pred_region
          %365 = vsyncadd %s352, 0
          %s366 = smul.addr %s31, 2
          %s367 = smul.addr %s366, 4
          %s368 = scalar_lea.hbm %s2, %s367
          %s370 = sshll.u32 %s355, 4
          %s371 = int_to_ptr.vmem [resolvable:$true] %s370
          %s372 = sshll.u32 %s368, 4
          %s373 = int_to_ptr.hbm [resolvable:$true] %s372
          %375 = dma.vmem_to_hbm [thread:$0]  %s371, 128, %s373, %s352
        $region44: #{tpu_custom_call.1} parent=27 // pred_fallthru
          _
        // Predicated region
        $region45: #{tpu_custom_call.1} parent=27 // pred_check
          %p376 = pneg %p139
        $region46: #{tpu_custom_call.1} parent=27 // pred_check_branch
          %378 = sbr.rel (%p376) target = $region48
        $region47: #{tpu_custom_call.1} parent=27 // pred_region
          %380 = vsyncadd %s357, 0
          %s381 = smul.addr %s31, 2
          %s382 = smul.addr %s381, 4
          %s383 = scalar_lea.hbm %s3, %s382
          %s385 = sshll.u32 %s360, 4
          %s386 = int_to_ptr.vmem [resolvable:$true] %s385
          %s387 = sshll.u32 %s383, 4
          %s388 = int_to_ptr.hbm [resolvable:$true] %s387
          %390 = dma.vmem_to_hbm [thread:$0]  %s386, 128, %s388, %s357
        $region48: #{tpu_custom_call.1} parent=27 // pred_fallthru
          _
      $region28: #{tpu_custom_call.1} parent=5 // pred_fallthru
        _
      %p391 = scmp.le.s32.totalorder 2, %s22
      // Predicated region
      $region49: #{tpu_custom_call.1} parent=5 // pred_check
        %p392 = pneg %p391
      $region50: #{tpu_custom_call.1} parent=5 // pred_check_branch
        %394 = sbr.rel (%p392) target = $region52
      $region51: #{tpu_custom_call.1} parent=5 // pred_region
        %s395 = ssub.s32 %s22, 2
        // Predicated region
        $region53: #{tpu_custom_call.1} parent=51 // pred_check
          %p396 = pneg %p119
        $region54: #{tpu_custom_call.1} parent=51 // pred_check_branch
          %398 = sbr.rel (%p396) target = $region56
        $region55: #{tpu_custom_call.1} parent=51 // pred_region
          %s399 = sand.u32 %s104, 1
          %s400 = scalar_lea.sflag [#allocation4], %s399
          %s401 = sand.u32 %s104, 1
          %s402 = smul.addr %s401, 8
          %s403 = scalar_lea.vmem [#allocation7], %s402
          %405 = dma.done %s400, 128
        $region56: #{tpu_custom_call.1} parent=51 // pred_fallthru
          _
        // Predicated region
        $region57: #{tpu_custom_call.1} parent=51 // pred_check
          %p406 = pneg %p145
        $region58: #{tpu_custom_call.1} parent=51 // pred_check_branch
          %408 = sbr.rel (%p406) target = $region60
        $region59: #{tpu_custom_call.1} parent=51 // pred_region
          %s409 = sand.u32 %s130, 1
          %s410 = scalar_lea.sflag [#allocation9], %s409
          %s411 = sand.u32 %s130, 1
          %s412 = smul.addr %s411, 8
          %s413 = scalar_lea.vmem [#allocation8], %s412
          %415 = dma.done %s410, 128
        $region60: #{tpu_custom_call.1} parent=51 // pred_fallthru
          _
      $region52: #{tpu_custom_call.1} parent=5 // pred_fallthru
        _
    $region6: #{tpu_custom_call.1} parent=1 // loop_footer
      %s26 = sadd.s32 1, %s22
    $region7: #{tpu_custom_call.1} parent=1 // loop_footer_branch
      %21 = sbr.rel target = $region3
    $region8: #{tpu_custom_call.1} parent=1 // loop_exit
      _
    %416 = vsyncpa [#allocation3], 1
    %s417 = scalar_lea.sflag [#allocation3], 1
    %418 = vsyncpa %s417, 1
    %419 = vsyncpa [#allocation6], 1
    %s420 = scalar_lea.sflag [#allocation6], 1
    %421 = vsyncpa %s420, 1
    %422 = vsyncpa [#allocation4], 1
    %s423 = scalar_lea.sflag [#allocation4], 1
    %424 = vsyncpa %s423, 1
    %425 = vsyncpa [#allocation9], 1
    %s426 = scalar_lea.sflag [#allocation9], 1
    %427 = vsyncpa %s426, 1

</llo_original>
